<compile_context>
chip_gen: v6e
topology: v6e:2x2x1
jax: 0.10.0
libtpu: 0.0.40
codegen_flags: <defaults>
</compile_context>

<pallas_src>
import jax
import jax.numpy as jnp
from jax.experimental import pallas as pl
from jax.experimental.pallas import tpu as pltpu

LANE = 128
SUBLANE = 16  # multiple of 16 satisfies both bf16 (16,128) and f32 (8,128) tiling


def _round_up(n, m):
    return ((n + m - 1) // m) * m


def _vmem_capacity_bytes():
    """Physical VMEM of the current chip (fallback: v7x's 64 MiB)."""
    try:
        return int(pltpu.get_tpu_info().vmem_capacity_bytes)
    except Exception:
        return 64 << 20


def subnet_kernel(x_ref, w1_ref, b1_ref, w2_ref, b2_ref, w3_ref, b3_ref, o_ref):
    """Fused 3x (bf16 matmul -> f32 bias add + ReLU); weights resident, batch streamed."""
    # Dropout is identity in eval mode; BatchNorm is unused in the reference forward.
    x = x_ref[...].astype(jnp.bfloat16)  # f32 -> bf16 cast fused into the kernel

    y1 = jnp.dot(x, w1_ref[...], preferred_element_type=jnp.float32) + b1_ref[...]
    y1 = jnp.maximum(y1, 0.0)

    y2 = jnp.dot(y1.astype(jnp.bfloat16), w2_ref[...],
                 preferred_element_type=jnp.float32) + b2_ref[...]
    y2 = jnp.maximum(y2, 0.0)

    y3 = jnp.dot(y2.astype(jnp.bfloat16), w3_ref[...],
                 preferred_element_type=jnp.float32) + b3_ref[...]
    y3 = jnp.maximum(y3, 0.0)

    o_ref[...] = y3.astype(o_ref.dtype)


def prepare_params(params):
    """One-time parameter prep (hoisted out of the forward path).

    Weights -> bf16 for the MXU; biases stay f32 as (1, hidden) rows.
    """
    return {
        "w1": jnp.asarray(params["w1"], jnp.bfloat16),
        "w2": jnp.asarray(params["w2"], jnp.bfloat16),
        "w3": jnp.asarray(params["w3"], jnp.bfloat16),
        "b1": jnp.asarray(params["b1"], jnp.float32).reshape(1, -1),
        "b2": jnp.asarray(params["b2"], jnp.float32).reshape(1, -1),
        "b3": jnp.asarray(params["b3"], jnp.float32).reshape(1, -1),
    }


def subnet_forward(x, params, *, tb_max=512, out_dtype=jnp.float32):
    """x: (B, in_size) float32. params: preferably output of prepare_params()."""
    w1 = params["w1"]
    if w1.dtype != jnp.bfloat16:  # accept raw f32 params too (prefer prepare_params once)
        params = prepare_params(params)
        w1 = params["w1"]
    b1, w2, b2, w3, b3 = params["b1"], params["w2"], params["b2"], params["w3"], params["b3"]

    B, in_size = x.shape
    hidden = w1.shape[1]
    x = x.astype(jnp.float32)
    out_bytes = jnp.dtype(out_dtype).itemsize

    # --- VMEM budget (single-buffered bf16 weights, streamed activations) ------
    vmem_cap = _vmem_capacity_bytes()
    budget = max(vmem_cap - (16 << 20), 32 << 20)  # leave ~16 MiB headroom

    in_v = _round_up(in_size, LANE)    # lane-padded VMEM footprints
    h_v = _round_up(hidden, LANE)
    weight_bytes = (in_size * hidden + 2 * hidden * hidden) * 2   # bf16, 1x resident
    bias_bytes = 3 * 8 * h_v * 4                                  # f32, tile-padded

    def act_bytes(tb):
        return (2 * tb * in_v * 4            # x stream (f32), double-buffered
                + 2 * tb * h_v * out_bytes   # out stream, double-buffered
                + 3 * tb * h_v * 4           # f32 intermediates (y1, y2, y3)
                + 2 * tb * h_v * 2)          # bf16 re-casts feeding the next matmul

    # --- batch tile size --------------------------------------------------------
    if B <= tb_max:
        if B > SUBLANE:
            # >=2 tiles so dimension_semantics=("parallel",) gives both of v7x's
            # TensorCores a batch tile to work on.
            tb = _round_up(pl.cdiv(B, 2), SUBLANE)
        else:
            tb = SUBLANE
    else:
        tb = tb_max  # multiple of 128: clean M mapping onto the MXU
    # Gate tb down if resident weights + activation tiles would exceed the budget
    # (e.g. large hidden on v7x's 64 MiB VMEM).
    while tb > SUBLANE and (weight_bytes + bias_bytes + act_bytes(tb)) > budget:
        tb = max(_round_up(tb // 2, SUBLANE), SUBLANE)

    Bp = _round_up(B, tb)
    num_tiles = Bp // tb
    # Zero-pad batch only (padded rows are sliced off; feature axes stay unpadded).
    x_p = x if Bp == B else jnp.pad(x, ((0, Bp - B), (0, 0)))

    # Conservative limit: covers the double-buffered-weight fallback path too.
    vmem_need = 2 * weight_bytes + 2 * bias_bytes + act_bytes(tb)
    vmem_limit = int(min(max(vmem_need + (8 << 20), 32 << 20), vmem_cap))

    flops = 2 * Bp * (in_size * hidden + 2 * hidden * hidden)
    bytes_accessed = (B * in_size * 4            # x (f32, unpadded)
                      + weight_bytes             # bf16 weights
                      + 3 * hidden * 4           # f32 biases
                      + Bp * hidden * out_bytes) # output writeback
    cost = pl.CostEstimate(flops=flops, transcendentals=0,
                           bytes_accessed=bytes_accessed)

    def _call(single_buffer_weights):
        if single_buffer_weights:
            # Constant index_map -> one buffer is enough; halves weight VMEM.
            res = lambda s: pl.BlockSpec(s, lambda i: (0, 0),
                                         pipeline_mode=pl.Buffered(1))
        else:
            res = lambda s: pl.BlockSpec(s, lambda i: (0, 0))
        return pl.pallas_call(
            subnet_kernel,
            out_shape=jax.ShapeDtypeStruct((Bp, hidden), out_dtype),
            grid=(num_tiles,),
            in_specs=[
                pl.BlockSpec((tb, in_size), lambda i: (i, 0)),   # x: batch-streamed
                res((in_size, hidden)), res((1, hidden)),        # layer 1 (resident)
                res((hidden, hidden)), res((1, hidden)),         # layer 2 (resident)
                res((hidden, hidden)), res((1, hidden)),         # layer 3 (resident)
            ],
            out_specs=pl.BlockSpec((tb, hidden), lambda i: (i, 0)),
            compiler_params=pltpu.CompilerParams(
                dimension_semantics=("parallel",),  # megacore: shard batch tiles
                vmem_limit_bytes=vmem_limit,
            ),
            cost_estimate=cost,
        )(x_p, w1, b1, w2, b2, w3, b3)

    use_single_buffer = hasattr(pl, "Buffered")
    try:
        out_p = _call(use_single_buffer)
    except Exception:
        if not use_single_buffer:
            raise
        out_p = _call(False)  # fallback: default (double-buffered) resident weights

    return out_p if Bp == B else out_p[:B]


def init_params(key, in_size, hidden):
    """Deterministic init mirroring nn.Linear default (uniform +/- 1/sqrt(fan_in))."""
    ks = jax.random.split(key, 6)

    def linear(kw, kb, fan_in, fan_out):
        bound = 1.0 / jnp.sqrt(fan_in)
        w = jax.random.uniform(kw, (fan_in, fan_out), jnp.float32, -bound, bound)
        b = jax.random.uniform(kb, (1, fan_out), jnp.float32, -bound, bound)
        return w, b

    w1, b1 = linear(ks[0], ks[1], in_size, hidden)
    w2, b2 = linear(ks[2], ks[3], hidden, hidden)
    w3, b3 = linear(ks[4], ks[5], hidden, hidden)
    return {"w1": w1, "b1": b1, "w2": w2, "b2": b2, "w3": w3, "b3": b3}


def subnet_ref(x, p):
    """Pure-JAX f32 reference for correctness checking."""
    y1 = jax.nn.relu(x @ p["w1"] + p["b1"])
    y2 = jax.nn.relu(y1 @ p["w2"] + p["b2"])
    y3 = jax.nn.relu(y2 @ p["w3"] + p["b3"])
    return y3


if __name__ == "__main__":
    B, in_size, hidden = 2, 16, 32
    key = jax.random.PRNGKey(0)
    kx, kp = jax.random.split(key)

    x = jax.random.normal(kx, (B, in_size), jnp.float32)
    params = init_params(kp, in_size, hidden)
    prepared = prepare_params(params)  # one-time weight prep, hoisted out of forward

    out = subnet_forward(x, prepared)
    jax.block_until_ready(out)

    ref = subnet_ref(x, params)
    assert out.shape == (B, hidden)
    # bf16 MXU operands -> relaxed tolerance vs the f32 reference.
    assert jnp.allclose(out, ref, atol=2e-2, rtol=2e-2), "mismatch vs JAX reference"

    print("KERNEL_OK")
</pallas_src>

<mosaic_0001>
module attributes {stable_mosaic.version = 11 : i64} {
  func.func @subnet_kernel(%arg0: i32, %arg1: memref<16x16xf32, #tpu.memory_space<vmem>>, %arg2: memref<16x32xbf16, #tpu.memory_space<vmem>>, %arg3: memref<1x32xf32, #tpu.memory_space<vmem>>, %arg4: memref<32x32xbf16, #tpu.memory_space<vmem>>, %arg5: memref<1x32xf32, #tpu.memory_space<vmem>>, %arg6: memref<32x32xbf16, #tpu.memory_space<vmem>>, %arg7: memref<1x32xf32, #tpu.memory_space<vmem>>, %arg8: memref<16x32xf32, #tpu.memory_space<vmem>>) attributes {dimension_semantics = [#tpu.dimension_semantics<parallel>], iteration_bounds = array<i64: 1>, scalar_prefetch = 0 : i64, scratch_operands = 0 : i64, tpu.core_type = #tpu.core_type<tc>, window_params = [{transform_indices = @transform_0, window_bounds = array<i64: 16, 16>}, {pipeline_mode = #tpu.pipeline_mode<synchronous>, transform_indices = @transform_1, window_bounds = array<i64: 16, 32>}, {pipeline_mode = #tpu.pipeline_mode<synchronous>, transform_indices = @transform_2, window_bounds = array<i64: 1, 32>}, {pipeline_mode = #tpu.pipeline_mode<synchronous>, transform_indices = @transform_3, window_bounds = array<i64: 32, 32>}, {pipeline_mode = #tpu.pipeline_mode<synchronous>, transform_indices = @transform_4, window_bounds = array<i64: 1, 32>}, {pipeline_mode = #tpu.pipeline_mode<synchronous>, transform_indices = @transform_5, window_bounds = array<i64: 32, 32>}, {pipeline_mode = #tpu.pipeline_mode<synchronous>, transform_indices = @transform_6, window_bounds = array<i64: 1, 32>}, {transform_indices = @transform_7, window_bounds = array<i64: 16, 32>}]} {
    %c0 = arith.constant 0 : index
    %c0_0 = arith.constant 0 : index
    %0 = vector.load %arg1[%c0, %c0_0] : memref<16x16xf32, #tpu.memory_space<vmem>>, vector<16x16xf32>
    %1 = arith.truncf %0 : vector<16x16xf32> to vector<16x16xbf16>
    %c0_1 = arith.constant 0 : index
    %c0_2 = arith.constant 0 : index
    %2 = vector.load %arg2[%c0_1, %c0_2] : memref<16x32xbf16, #tpu.memory_space<vmem>>, vector<16x32xbf16>
    %cst = arith.constant dense<0.000000e+00> : vector<16x32xf32>
    %3 = tpu.matmul %1, %2, %cst {dimension_numbers = #tpu.dot_dimension_numbers<[1], [0], [0], [1], [0, 0, 1, 1], [], []>} : vector<16x16xbf16>, vector<16x32xbf16>, vector<16x32xf32> -> vector<16x32xf32>
    %c0_3 = arith.constant 0 : index
    %c0_4 = arith.constant 0 : index
    %4 = vector.load %arg3[%c0_3, %c0_4] : memref<1x32xf32, #tpu.memory_space<vmem>>, vector<1x32xf32>
    %5 = vector.broadcast %4 : vector<1x32xf32> to vector<16x32xf32>
    %6 = arith.addf %3, %5 : vector<16x32xf32>
    %cst_5 = arith.constant 0.000000e+00 : f32
    %7 = vector.broadcast %cst_5 : f32 to vector<16x32xf32>
    %8 = arith.maximumf %6, %7 : vector<16x32xf32>
    %9 = arith.truncf %8 : vector<16x32xf32> to vector<16x32xbf16>
    %c0_6 = arith.constant 0 : index
    %c0_7 = arith.constant 0 : index
    %10 = vector.load %arg4[%c0_6, %c0_7] : memref<32x32xbf16, #tpu.memory_space<vmem>>, vector<32x32xbf16>
    %cst_8 = arith.constant dense<0.000000e+00> : vector<16x32xf32>
    %11 = tpu.matmul %9, %10, %cst_8 {dimension_numbers = #tpu.dot_dimension_numbers<[1], [0], [0], [1], [0, 0, 1, 1], [], []>} : vector<16x32xbf16>, vector<32x32xbf16>, vector<16x32xf32> -> vector<16x32xf32>
    %c0_9 = arith.constant 0 : index
    %c0_10 = arith.constant 0 : index
    %12 = vector.load %arg5[%c0_9, %c0_10] : memref<1x32xf32, #tpu.memory_space<vmem>>, vector<1x32xf32>
    %13 = vector.broadcast %12 : vector<1x32xf32> to vector<16x32xf32>
    %14 = arith.addf %11, %13 : vector<16x32xf32>
    %cst_11 = arith.constant 0.000000e+00 : f32
    %15 = vector.broadcast %cst_11 : f32 to vector<16x32xf32>
    %16 = arith.maximumf %14, %15 : vector<16x32xf32>
    %17 = arith.truncf %16 : vector<16x32xf32> to vector<16x32xbf16>
    %c0_12 = arith.constant 0 : index
    %c0_13 = arith.constant 0 : index
    %18 = vector.load %arg6[%c0_12, %c0_13] : memref<32x32xbf16, #tpu.memory_space<vmem>>, vector<32x32xbf16>
    %cst_14 = arith.constant dense<0.000000e+00> : vector<16x32xf32>
    %19 = tpu.matmul %17, %18, %cst_14 {dimension_numbers = #tpu.dot_dimension_numbers<[1], [0], [0], [1], [0, 0, 1, 1], [], []>} : vector<16x32xbf16>, vector<32x32xbf16>, vector<16x32xf32> -> vector<16x32xf32>
    %c0_15 = arith.constant 0 : index
    %c0_16 = arith.constant 0 : index
    %20 = vector.load %arg7[%c0_15, %c0_16] : memref<1x32xf32, #tpu.memory_space<vmem>>, vector<1x32xf32>
    %21 = vector.broadcast %20 : vector<1x32xf32> to vector<16x32xf32>
    %22 = arith.addf %19, %21 : vector<16x32xf32>
    %cst_17 = arith.constant 0.000000e+00 : f32
    %23 = vector.broadcast %cst_17 : f32 to vector<16x32xf32>
    %24 = arith.maximumf %22, %23 : vector<16x32xf32>
    %c0_18 = arith.constant 0 : index
    %c0_19 = arith.constant 0 : index
    %25 = vector.load %arg8[%c0_18, %c0_19] : memref<16x32xf32, #tpu.memory_space<vmem>>, vector<16x32xf32>
    tpu.vector_store %arg8[%c0_18, %c0_19], %24 {strides = array<i32>} : memref<16x32xf32, #tpu.memory_space<vmem>>, vector<16x32xf32>,
    return
  }
  func.func @transform_0(%arg0: i32) -> (i32, i32) {
    %c0_i32 = arith.constant 0 : i32
    %c0_i32_0 = arith.constant 0 : i32
    return %arg0, %c0_i32 : i32, i32
  }
  func.func @transform_1(%arg0: i32) -> (i32, i32) {
    %c0_i32 = arith.constant 0 : i32
    %c0_i32_0 = arith.constant 0 : i32
    %c0_i32_1 = arith.constant 0 : i32
    return %c0_i32, %c0_i32_0 : i32, i32
  }
  func.func @transform_2(%arg0: i32) -> (i32, i32) {
    %c0_i32 = arith.constant 0 : i32
    %c0_i32_0 = arith.constant 0 : i32
    %c0_i32_1 = arith.constant 0 : i32
    return %c0_i32, %c0_i32_0 : i32, i32
  }
  func.func @transform_3(%arg0: i32) -> (i32, i32) {
    %c0_i32 = arith.constant 0 : i32
    %c0_i32_0 = arith.constant 0 : i32
    %c0_i32_1 = arith.constant 0 : i32
    return %c0_i32, %c0_i32_0 : i32, i32
  }
  func.func @transform_4(%arg0: i32) -> (i32, i32) {
    %c0_i32 = arith.constant 0 : i32
    %c0_i32_0 = arith.constant 0 : i32
    %c0_i32_1 = arith.constant 0 : i32
    return %c0_i32, %c0_i32_0 : i32, i32
  }
  func.func @transform_5(%arg0: i32) -> (i32, i32) {
    %c0_i32 = arith.constant 0 : i32
    %c0_i32_0 = arith.constant 0 : i32
    %c0_i32_1 = arith.constant 0 : i32
    return %c0_i32, %c0_i32_0 : i32, i32
  }
  func.func @transform_6(%arg0: i32) -> (i32, i32) {
    %c0_i32 = arith.constant 0 : i32
    %c0_i32_0 = arith.constant 0 : i32
    %c0_i32_1 = arith.constant 0 : i32
    return %c0_i32, %c0_i32_0 : i32, i32
  }
  func.func @transform_7(%arg0: i32) -> (i32, i32) {
    %c0_i32 = arith.constant 0 : i32
    %c0_i32_0 = arith.constant 0 : i32
    return %arg0, %c0_i32 : i32, i32
  }
}

module attributes {stable_mosaic.version = 11 : i64} {
  func.func @subnet_kernel(%arg0: i32, %arg1: memref<16x16xf32, #tpu.memory_space<vmem>>, %arg2: memref<16x32xbf16, #tpu.memory_space<vmem>>, %arg3: memref<1x32xf32, #tpu.memory_space<vmem>>, %arg4: memref<32x32xbf16, #tpu.memory_space<vmem>>, %arg5: memref<1x32xf32, #tpu.memory_space<vmem>>, %arg6: memref<32x32xbf16, #tpu.memory_space<vmem>>, %arg7: memref<1x32xf32, #tpu.memory_space<vmem>>, %arg8: memref<16x32xf32, #tpu.memory_space<vmem>>) attributes {dimension_semantics = [#tpu.dimension_semantics<parallel>], iteration_bounds = array<i64: 1>, scalar_prefetch = 0 : i64, scratch_operands = 0 : i64, tpu.core_type = #tpu.core_type<tc>, window_params = [{transform_indices = @transform_0, window_bounds = array<i64: 16, 16>}, {pipeline_mode = #tpu.pipeline_mode<synchronous>, transform_indices = @transform_1, window_bounds = array<i64: 16, 32>}, {pipeline_mode = #tpu.pipeline_mode<synchronous>, transform_indices = @transform_2, window_bounds = array<i64: 1, 32>}, {pipeline_mode = #tpu.pipeline_mode<synchronous>, transform_indices = @transform_3, window_bounds = array<i64: 32, 32>}, {pipeline_mode = #tpu.pipeline_mode<synchronous>, transform_indices = @transform_4, window_bounds = array<i64: 1, 32>}, {pipeline_mode = #tpu.pipeline_mode<synchronous>, transform_indices = @transform_5, window_bounds = array<i64: 32, 32>}, {pipeline_mode = #tpu.pipeline_mode<synchronous>, transform_indices = @transform_6, window_bounds = array<i64: 1, 32>}, {transform_indices = @transform_7, window_bounds = array<i64: 16, 32>}]} {
    %c0 = arith.constant 0 : index
    %c0_0 = arith.constant 0 : index
    %0 = vector.load %arg1[%c0, %c0_0] : memref<16x16xf32, #tpu.memory_space<vmem>>, vector<16x16xf32>
    %1 = arith.truncf %0 : vector<16x16xf32> to vector<16x16xbf16>
    %c0_1 = arith.constant 0 : index
    %c0_2 = arith.constant 0 : index
    %2 = vector.load %arg2[%c0_1, %c0_2] : memref<16x32xbf16, #tpu.memory_space<vmem>>, vector<16x32xbf16>
    %cst = arith.constant dense<0.000000e+00> : vector<16x32xf32>
    %3 = tpu.matmul %1, %2, %cst {dimension_numbers = #tpu.dot_dimension_numbers<[1], [0], [0], [1], [0, 0, 1, 1], [], []>} : vector<16x16xbf16>, vector<16x32xbf16>, vector<16x32xf32> -> vector<16x32xf32>
    %c0_3 = arith.constant 0 : index
    %c0_4 = arith.constant 0 : index
    %4 = vector.load %arg3[%c0_3, %c0_4] : memref<1x32xf32, #tpu.memory_space<vmem>>, vector<1x32xf32>
    %5 = vector.broadcast %4 : vector<1x32xf32> to vector<16x32xf32>
    %6 = arith.addf %3, %5 : vector<16x32xf32>
    %cst_5 = arith.constant 0.000000e+00 : f32
    %7 = vector.broadcast %cst_5 : f32 to vector<16x32xf32>
    %8 = arith.maximumf %6, %7 : vector<16x32xf32>
    %9 = arith.truncf %8 : vector<16x32xf32> to vector<16x32xbf16>
    %c0_6 = arith.constant 0 : index
    %c0_7 = arith.constant 0 : index
    %10 = vector.load %arg4[%c0_6, %c0_7] : memref<32x32xbf16, #tpu.memory_space<vmem>>, vector<32x32xbf16>
    %cst_8 = arith.constant dense<0.000000e+00> : vector<16x32xf32>
    %11 = tpu.matmul %9, %10, %cst_8 {dimension_numbers = #tpu.dot_dimension_numbers<[1], [0], [0], [1], [0, 0, 1, 1], [], []>} : vector<16x32xbf16>, vector<32x32xbf16>, vector<16x32xf32> -> vector<16x32xf32>
    %c0_9 = arith.constant 0 : index
    %c0_10 = arith.constant 0 : index
    %12 = vector.load %arg5[%c0_9, %c0_10] : memref<1x32xf32, #tpu.memory_space<vmem>>, vector<1x32xf32>
    %13 = vector.broadcast %12 : vector<1x32xf32> to vector<16x32xf32>
    %14 = arith.addf %11, %13 : vector<16x32xf32>
    %cst_11 = arith.constant 0.000000e+00 : f32
    %15 = vector.broadcast %cst_11 : f32 to vector<16x32xf32>
    %16 = arith.maximumf %14, %15 : vector<16x32xf32>
    %17 = arith.truncf %16 : vector<16x32xf32> to vector<16x32xbf16>
    %c0_12 = arith.constant 0 : index
    %c0_13 = arith.constant 0 : index
    %18 = vector.load %arg6[%c0_12, %c0_13] : memref<32x32xbf16, #tpu.memory_space<vmem>>, vector<32x32xbf16>
    %cst_14 = arith.constant dense<0.000000e+00> : vector<16x32xf32>
    %19 = tpu.matmul %17, %18, %cst_14 {dimension_numbers = #tpu.dot_dimension_numbers<[1], [0], [0], [1], [0, 0, 1, 1], [], []>} : vector<16x32xbf16>, vector<32x32xbf16>, vector<16x32xf32> -> vector<16x32xf32>
    %c0_15 = arith.constant 0 : index
    %c0_16 = arith.constant 0 : index
    %20 = vector.load %arg7[%c0_15, %c0_16] : memref<1x32xf32, #tpu.memory_space<vmem>>, vector<1x32xf32>
    %21 = vector.broadcast %20 : vector<1x32xf32> to vector<16x32xf32>
    %22 = arith.addf %19, %21 : vector<16x32xf32>
    %cst_17 = arith.constant 0.000000e+00 : f32
    %23 = vector.broadcast %cst_17 : f32 to vector<16x32xf32>
    %24 = arith.maximumf %22, %23 : vector<16x32xf32>
    %c0_18 = arith.constant 0 : index
    %c0_19 = arith.constant 0 : index
    %25 = vector.load %arg8[%c0_18, %c0_19] : memref<16x32xf32, #tpu.memory_space<vmem>>, vector<16x32xf32>
    tpu.vector_store %arg8[%c0_18, %c0_19], %24 {strides = array<i32>} : memref<16x32xf32, #tpu.memory_space<vmem>>, vector<16x32xf32>,
    return
  }
  func.func @transform_0(%arg0: i32) -> (i32, i32) {
    %c0_i32 = arith.constant 0 : i32
    %c0_i32_0 = arith.constant 0 : i32
    return %arg0, %c0_i32 : i32, i32
  }
  func.func @transform_1(%arg0: i32) -> (i32, i32) {
    %c0_i32 = arith.constant 0 : i32
    %c0_i32_0 = arith.constant 0 : i32
    %c0_i32_1 = arith.constant 0 : i32
    return %c0_i32, %c0_i32_0 : i32, i32
  }
  func.func @transform_2(%arg0: i32) -> (i32, i32) {
    %c0_i32 = arith.constant 0 : i32
    %c0_i32_0 = arith.constant 0 : i32
    %c0_i32_1 = arith.constant 0 : i32
    return %c0_i32, %c0_i32_0 : i32, i32
  }
  func.func @transform_3(%arg0: i32) -> (i32, i32) {
    %c0_i32 = arith.constant 0 : i32
    %c0_i32_0 = arith.constant 0 : i32
    %c0_i32_1 = arith.constant 0 : i32
    return %c0_i32, %c0_i32_0 : i32, i32
  }
  func.func @transform_4(%arg0: i32) -> (i32, i32) {
    %c0_i32 = arith.constant 0 : i32
    %c0_i32_0 = arith.constant 0 : i32
    %c0_i32_1 = arith.constant 0 : i32
    return %c0_i32, %c0_i32_0 : i32, i32
  }
  func.func @transform_5(%arg0: i32) -> (i32, i32) {
    %c0_i32 = arith.constant 0 : i32
    %c0_i32_0 = arith.constant 0 : i32
    %c0_i32_1 = arith.constant 0 : i32
    return %c0_i32, %c0_i32_0 : i32, i32
  }
  func.func @transform_6(%arg0: i32) -> (i32, i32) {
    %c0_i32 = arith.constant 0 : i32
    %c0_i32_0 = arith.constant 0 : i32
    %c0_i32_1 = arith.constant 0 : i32
    return %c0_i32, %c0_i32_0 : i32, i32
  }
  func.func @transform_7(%arg0: i32) -> (i32, i32) {
    %c0_i32 = arith.constant 0 : i32
    %c0_i32_0 = arith.constant 0 : i32
    return %arg0, %c0_i32 : i32, i32
  }
}

</mosaic_0001>

<llo_original>
// kernel: tpu_custom_call.1
$region0: #{tpu_custom_call.1}
  #allocation0 [shape = 'u32[]', space=smem, size = 0x4, offset = 0x4, fixed_abs, tag = 'smem constant byte address 0x4 - core index']
  #allocation1 [shape = 'u32[144,128]{1,0:T(1,128)}', space=vmem, size = 0x12000, scoped, tag = 'internal scratch']
  %s0 = inlined_call_operand.hbm [shape: f32[16,16], index: 0, kind: input, shape index: {}]
  %s1 = inlined_call_operand.hbm [shape: bf16[16,32], index: 1, kind: input, shape index: {}]
  %s2 = inlined_call_operand.vmem [shape: f32[1,32], index: 2, kind: input, shape index: {}]
  %s3 = inlined_call_operand.hbm [shape: bf16[32,32], index: 3, kind: input, shape index: {}]
  %s4 = inlined_call_operand.vmem [shape: f32[1,32], index: 4, kind: input, shape index: {}]
  %s5 = inlined_call_operand.hbm [shape: bf16[32,32], index: 5, kind: input, shape index: {}]
  %s6 = inlined_call_operand.vmem [shape: f32[1,32], index: 6, kind: input, shape index: {}]
  %s7 = inlined_call_operand.hbm [shape: f32[16,32], index: 7, kind: output, shape index: {}]
  %s8 = sld [smem:[#allocation0]]
  $region54: #{tpu_custom_call.1} parent=0
    _
  %s10 = ssub.s32 1, %s8
  %s11 = scalar_select 0, %s10, %s8
  $region1: #{tpu_custom_call.1} parent=0
    #allocation2 [shape = 'u8[8192]{0}', space=vmem, size = 0x2000, scoped, tag = 'input window, operand 0, single buffered']
    #allocation3 [shape = 's32[1]{0}', space=sflag, size = 0x4, scoped, tag = 'scoped memory for tpu_custom_call.1']
    #allocation4 [shape = 's32[1]{0}', space=sflag, size = 0x4, scoped, tag = 'scoped memory for tpu_custom_call.1']
    #allocation5 [shape = 'u8[4096]{0}', space=vmem, size = 0x1000, scoped, tag = 'input window, operand 1, single buffered']
    #allocation6 [shape = 's32[1]{0}', space=sflag, size = 0x4, scoped, tag = 'scoped memory for tpu_custom_call.1']
    #allocation7 [shape = 'u8[8192]{0}', space=vmem, size = 0x2000, scoped, tag = 'input window, operand 3, single buffered']
    #allocation8 [shape = 'u8[8192]{0}', space=vmem, size = 0x2000, scoped, tag = 'input window, operand 5, single buffered']
    #allocation9 [shape = 's32[1]{0}', space=sflag, size = 0x4, scoped, tag = 'scoped memory for tpu_custom_call.1']
    #allocation10 [shape = 'u8[8192]{0}', space=vmem, size = 0x2000, scoped, tag = 'output window, operand 0, single buffered']
    %12 = vsyncpa [#allocation3], 0
    %13 = vsyncpa [#allocation6], 0
    %14 = vsyncpa [#allocation9], 0
    %15 = vsyncpa [#allocation4], 0
    // Predicated region
    $region2: #{tpu_custom_call.1} parent=1 // pred_check
      _
    $region3: #{tpu_custom_call.1} parent=1 // pred_check_branch
      %17 = sbr.rel (0) target = $region5
    $region4: #{tpu_custom_call.1} parent=1 // pred_region
      %s19 = ssub.s32 256, 256
      %20 = vsyncadd [#allocation3], %s19
      %s21 = sshll.u32 [#allocation2], 4
      %s22 = int_to_ptr.vmem [resolvable:$true] %s21
      %27 = dma.hbm_to_vmem [thread:$0]  %s0, 256, %s22, [#allocation3], 128, 128, 8
    $region5: #{tpu_custom_call.1} parent=1 // pred_fallthru
      _
    // Predicated region
    $region6: #{tpu_custom_call.1} parent=1 // pred_check
      _
    $region7: #{tpu_custom_call.1} parent=1 // pred_check_branch
      %29 = sbr.rel (0) target = $region9
    $region8: #{tpu_custom_call.1} parent=1 // pred_region
      %s31 = ssub.s32 128, 128
      %32 = vsyncadd [#allocation6], %s31
      %s33 = sshll.u32 [#allocation5], 4
      %s34 = int_to_ptr.vmem [resolvable:$true] %s33
      %39 = dma.hbm_to_vmem [thread:$0]  %s1, 128, %s34, [#allocation6], 64, 64, 4
    $region9: #{tpu_custom_call.1} parent=1 // pred_fallthru
      _
    // Predicated region
    $region10: #{tpu_custom_call.1} parent=1 // pred_check
      _
    $region11: #{tpu_custom_call.1} parent=1 // pred_check_branch
      %41 = sbr.rel (0) target = $region13
    $region12: #{tpu_custom_call.1} parent=1 // pred_region
      _
    $region13: #{tpu_custom_call.1} parent=1 // pred_fallthru
      _
    // Predicated region
    $region14: #{tpu_custom_call.1} parent=1 // pred_check
      _
    $region15: #{tpu_custom_call.1} parent=1 // pred_check_branch
      %43 = sbr.rel (0) target = $region17
    $region16: #{tpu_custom_call.1} parent=1 // pred_region
      %s45 = ssub.s32 256, 256
      %46 = vsyncadd [#allocation6], %s45
      %s47 = sshll.u32 [#allocation7], 4
      %s48 = int_to_ptr.vmem [resolvable:$true] %s47
      %53 = dma.hbm_to_vmem [thread:$0]  %s3, 256, %s48, [#allocation6], 64, 64, 4
    $region17: #{tpu_custom_call.1} parent=1 // pred_fallthru
      _
    // Predicated region
    $region18: #{tpu_custom_call.1} parent=1 // pred_check
      _
    $region19: #{tpu_custom_call.1} parent=1 // pred_check_branch
      %55 = sbr.rel (0) target = $region21
    $region20: #{tpu_custom_call.1} parent=1 // pred_region
      _
    $region21: #{tpu_custom_call.1} parent=1 // pred_fallthru
      _
    // Predicated region
    $region22: #{tpu_custom_call.1} parent=1 // pred_check
      _
    $region23: #{tpu_custom_call.1} parent=1 // pred_check_branch
      %57 = sbr.rel (0) target = $region25
    $region24: #{tpu_custom_call.1} parent=1 // pred_region
      %s59 = ssub.s32 256, 256
      %60 = vsyncadd [#allocation9], %s59
      %s61 = sshll.u32 [#allocation8], 4
      %s62 = int_to_ptr.vmem [resolvable:$true] %s61
      %67 = dma.hbm_to_vmem [thread:$0]  %s5, 256, %s62, [#allocation9], 64, 64, 4
    $region25: #{tpu_custom_call.1} parent=1 // pred_fallthru
      _
    // Predicated region
    $region26: #{tpu_custom_call.1} parent=1 // pred_check
      _
    $region27: #{tpu_custom_call.1} parent=1 // pred_check_branch
      %69 = sbr.rel (0) target = $region29
    $region28: #{tpu_custom_call.1} parent=1 // pred_region
      _
    $region29: #{tpu_custom_call.1} parent=1 // pred_fallthru
      _
    // Predicated region
    $region30: #{tpu_custom_call.1} parent=1 // pred_check
      _
    $region31: #{tpu_custom_call.1} parent=1 // pred_check_branch
      %71 = sbr.rel (0) target = $region33
    $region32: #{tpu_custom_call.1} parent=1 // pred_region
      %72 = dma.done [#allocation3], 256
    $region33: #{tpu_custom_call.1} parent=1 // pred_fallthru
      _
    // Predicated region
    $region34: #{tpu_custom_call.1} parent=1 // pred_check
      _
    $region35: #{tpu_custom_call.1} parent=1 // pred_check_branch
      %74 = sbr.rel (0) target = $region37
    $region36: #{tpu_custom_call.1} parent=1 // pred_region
      %75 = dma.done [#allocation6], 128
    $region37: #{tpu_custom_call.1} parent=1 // pred_fallthru
      _
    // Predicated region
    $region38: #{tpu_custom_call.1} parent=1 // pred_check
      _
    $region39: #{tpu_custom_call.1} parent=1 // pred_check_branch
      %77 = sbr.rel (0) target = $region41
    $region40: #{tpu_custom_call.1} parent=1 // pred_region
      %78 = dma.done [#allocation6], 256
    $region41: #{tpu_custom_call.1} parent=1 // pred_fallthru
      _
    // Predicated region
    $region42: #{tpu_custom_call.1} parent=1 // pred_check
      _
    $region43: #{tpu_custom_call.1} parent=1 // pred_check_branch
      %80 = sbr.rel (0) target = $region45
    $region44: #{tpu_custom_call.1} parent=1 // pred_region
      %81 = dma.done [#allocation9], 256
    $region45: #{tpu_custom_call.1} parent=1 // pred_fallthru
      _
    %v83 = vld [vmem:[#allocation2] sm:$0xff]
    %v84 = vld [vmem:[#allocation2 + $0x8] sm:$0xff]
    %v85 = vpack.c.bf16 %v84, %v83
    %v86 = vld [vmem:[#allocation5] sm:$0xf]
    %v87 = vld [vmem:[#allocation5 + $0x4] sm:$0xf]
    %v88 = vld [vmem:[%s2] sm:$0x1]
    %v90 = vlaneseq
    %v91 = vshrl.u32 %v90, 7
    %v92 = vsub.s32 0, %v91
    %v93 = vrot.slane %v88, %v92
    %v97 = vunpack.c.l.b16 %v86
    %v98 = vunpack.c.l.b16 %v87
    %v99 = vpack.c.b16 %v98, %v97
    %vm101 = vcmask 130048
    %v103 = vsel %vm101, %v85, 0
    %105 = vmatprep.subr.bf16.mxu0 0
    %106 = vmatpush1.bf16.msra.mxu0 0
    %107 = vmatprep.subr.bf16.mxu0 0
    %108 = vmatpush1.bf16.msra.mxu0 0
    %109 = vmatprep.subr.bf16.mxu0 0
    %110 = vmatpush1.bf16.msra.mxu0 0
    %111 = vmatprep.subr.bf16.mxu0 0
    %112 = vmatpush1.bf16.msra.mxu0 0
    %113 = vmatprep.subr.bf16.mxu0 0
    %114 = vmatpush1.bf16.msra.mxu0 0
    %115 = vmatprep.subr.bf16.mxu0 0
    %116 = vmatpush1.bf16.msra.mxu0 0
    %117 = vmatprep.subr.bf16.mxu0 0
    %118 = vmatpush1.bf16.msra.mxu0 0
    %119 = vmatprep.subr.bf16.mxu0 0
    %120 = vmatpush1.bf16.msra.mxu0 %v99
    %121 = vmatprep.subr.bf16.mxu0 0
    %122 = vmatpush2.bf16.msra.mxu0 0
    %123 = vmatprep.subr.bf16.mxu0 0
    %124 = vmatpush2.bf16.msra.mxu0 0
    %125 = vmatprep.subr.bf16.mxu0 0
    %126 = vmatpush2.bf16.msra.mxu0 0
    %127 = vmatprep.subr.bf16.mxu0 0
    %128 = vmatpush2.bf16.msra.mxu0 0
    %129 = vmatprep.subr.bf16.mxu0 0
    %130 = vmatpush2.bf16.msra.mxu0 0
    %131 = vmatprep.subr.bf16.mxu0 0
    %132 = vmatpush2.bf16.msra.mxu0 0
    %133 = vmatprep.subr.bf16.mxu0 0
    %134 = vmatpush2.bf16.msra.mxu0 0
    %135 = vmatprep.subr.bf16.mxu0 0
    %136 = vmatpush2.bf16.msra.mxu0 0
    %137 = vmatprep.mubr.bf16.mxu0 0
    %138 = vmatmul.mubr.bf16.gmra.mxu0 %v103
    %v139 = vpop.f32.mrf.mxu0
    %v140 = vadd.f32 %v93, %v139
    %v141 = vpop.f32.mrf.mxu0
    %v142 = vpop.f32.mrf.mxu0
    %v143 = vadd.f32 %v93, %v142
    %v144 = vpop.f32.mrf.mxu0
    %145 = vdwg.mxu0
    %v146 = vmax.f32 %v140, 0.0
    %v147 = vmax.f32 %v143, 0.0
    %v148 = vpack.c.bf16 %v147, %v146
    %v149 = vld [vmem:[#allocation7] sm:$0xf]
    %v150 = vld [vmem:[#allocation7 + $0x4] sm:$0xf]
    %v151 = vld [vmem:[#allocation7 + $0x8] sm:$0xf]
    %v152 = vld [vmem:[#allocation7 + $0xc] sm:$0xf]
    %v153 = vld [vmem:[%s4] sm:$0x1]
    %v155 = vlaneseq
    %v156 = vshrl.u32 %v155, 7
    %v157 = vsub.s32 0, %v156
    %v158 = vrot.slane %v153, %v157
    %v164 = vunpack.c.l.b16 %v149
    %v165 = vunpack.c.l.b16 %v150
    %v166 = vunpack.c.l.b16 %v151
    %v167 = vunpack.c.l.b16 %v152
    %v168 = vpack.c.b16 %v165, %v164
    %v169 = vpack.c.b16 %v167, %v166
    %vm172 = vcmask 261120
    %v174 = vsel %vm172, %v148, 0
    %176 = vmatprep.subr.bf16.mxu0 0
    %177 = vmatpush1.bf16.msra.mxu0 0
    %178 = vmatprep.subr.bf16.mxu0 0
    %179 = vmatpush1.bf16.msra.mxu0 0
    %180 = vmatprep.subr.bf16.mxu0 0
    %181 = vmatpush1.bf16.msra.mxu0 0
    %182 = vmatprep.subr.bf16.mxu0 0
    %183 = vmatpush1.bf16.msra.mxu0 0
    %184 = vmatprep.subr.bf16.mxu0 0
    %185 = vmatpush1.bf16.msra.mxu0 0
    %186 = vmatprep.subr.bf16.mxu0 0
    %187 = vmatpush1.bf16.msra.mxu0 0
    %188 = vmatprep.subr.bf16.mxu0 0
    %189 = vmatpush1.bf16.msra.mxu0 %v169
    %190 = vmatprep.subr.bf16.mxu0 0
    %191 = vmatpush1.bf16.msra.mxu0 %v168
    %192 = vmatprep.subr.bf16.mxu0 0
    %193 = vmatpush2.bf16.msra.mxu0 0
    %194 = vmatprep.subr.bf16.mxu0 0
    %195 = vmatpush2.bf16.msra.mxu0 0
    %196 = vmatprep.subr.bf16.mxu0 0
    %197 = vmatpush2.bf16.msra.mxu0 0
    %198 = vmatprep.subr.bf16.mxu0 0
    %199 = vmatpush2.bf16.msra.mxu0 0
    %200 = vmatprep.subr.bf16.mxu0 0
    %201 = vmatpush2.bf16.msra.mxu0 0
    %202 = vmatprep.subr.bf16.mxu0 0
    %203 = vmatpush2.bf16.msra.mxu0 0
    %204 = vmatprep.subr.bf16.mxu0 0
    %205 = vmatpush2.bf16.msra.mxu0 0
    %206 = vmatprep.subr.bf16.mxu0 0
    %207 = vmatpush2.bf16.msra.mxu0 0
    %208 = vmatprep.mubr.bf16.mxu0 0
    %209 = vmatmul.mubr.bf16.gmra.mxu0 %v174
    %v210 = vpop.f32.mrf.mxu0
    %v211 = vadd.f32 %v158, %v210
    %v212 = vpop.f32.mrf.mxu0
    %v213 = vpop.f32.mrf.mxu0
    %v214 = vadd.f32 %v158, %v213
    %v215 = vpop.f32.mrf.mxu0
    %216 = vdwg.mxu0
    %v217 = vmax.f32 %v211, 0.0
    %v218 = vmax.f32 %v214, 0.0
    %v219 = vpack.c.bf16 %v218, %v217
    %v220 = vld [vmem:[#allocation8] sm:$0xf]
    %v221 = vld [vmem:[#allocation8 + $0x4] sm:$0xf]
    %v222 = vld [vmem:[#allocation8 + $0x8] sm:$0xf]
    %v223 = vld [vmem:[#allocation8 + $0xc] sm:$0xf]
    %v224 = vld [vmem:[%s6] sm:$0x1]
    %v226 = vlaneseq
    %v227 = vshrl.u32 %v226, 7
    %v228 = vsub.s32 0, %v227
    %v229 = vrot.slane %v224, %v228
    %v235 = vunpack.c.l.b16 %v220
    %v236 = vunpack.c.l.b16 %v221
    %v237 = vunpack.c.l.b16 %v222
    %v238 = vunpack.c.l.b16 %v223
    %v239 = vpack.c.b16 %v236, %v235
    %v240 = vpack.c.b16 %v238, %v237
    %v244 = vsel %vm172, %v219, 0
    %246 = vmatprep.subr.bf16.mxu0 0
    %247 = vmatpush1.bf16.msra.mxu0 0
    %248 = vmatprep.subr.bf16.mxu0 0
    %249 = vmatpush1.bf16.msra.mxu0 0
    %250 = vmatprep.subr.bf16.mxu0 0
    %251 = vmatpush1.bf16.msra.mxu0 0
    %252 = vmatprep.subr.bf16.mxu0 0
    %253 = vmatpush1.bf16.msra.mxu0 0
    %254 = vmatprep.subr.bf16.mxu0 0
    %255 = vmatpush1.bf16.msra.mxu0 0
    %256 = vmatprep.subr.bf16.mxu0 0
    %257 = vmatpush1.bf16.msra.mxu0 0
    %258 = vmatprep.subr.bf16.mxu0 0
    %259 = vmatpush1.bf16.msra.mxu0 %v240
    %260 = vmatprep.subr.bf16.mxu0 0
    %261 = vmatpush1.bf16.msra.mxu0 %v239
    %262 = vmatprep.subr.bf16.mxu0 0
    %263 = vmatpush2.bf16.msra.mxu0 0
    %264 = vmatprep.subr.bf16.mxu0 0
    %265 = vmatpush2.bf16.msra.mxu0 0
    %266 = vmatprep.subr.bf16.mxu0 0
    %267 = vmatpush2.bf16.msra.mxu0 0
    %268 = vmatprep.subr.bf16.mxu0 0
    %269 = vmatpush2.bf16.msra.mxu0 0
    %270 = vmatprep.subr.bf16.mxu0 0
    %271 = vmatpush2.bf16.msra.mxu0 0
    %272 = vmatprep.subr.bf16.mxu0 0
    %273 = vmatpush2.bf16.msra.mxu0 0
    %274 = vmatprep.subr.bf16.mxu0 0
    %275 = vmatpush2.bf16.msra.mxu0 0
    %276 = vmatprep.subr.bf16.mxu0 0
    %277 = vmatpush2.bf16.msra.mxu0 0
    %278 = vmatprep.mubr.bf16.mxu0 0
    %279 = vmatmul.mubr.bf16.gmra.mxu0 %v244
    %v280 = vpop.f32.mrf.mxu0
    %v281 = vadd.f32 %v229, %v280
    %v282 = vpop.f32.mrf.mxu0
    %v283 = vpop.f32.mrf.mxu0
    %v284 = vadd.f32 %v229, %v283
    %v285 = vpop.f32.mrf.mxu0
    %286 = vdwg.mxu0
    %v287 = vmax.f32 %v281, 0.0
    %v288 = vmax.f32 %v284, 0.0
    %289 = vst.msk [vmem:[#allocation10] sm:$0xff] %vm172, %v287
    %290 = vst.msk [vmem:[#allocation10 + $0x8] sm:$0xff] %vm172, %v288
    // Predicated region
    $region46: #{tpu_custom_call.1} parent=1 // pred_check
      _
    $region47: #{tpu_custom_call.1} parent=1 // pred_check_branch
      %292 = sbr.rel (0) target = $region49
    $region48: #{tpu_custom_call.1} parent=1 // pred_region
      %s294 = ssub.s32 256, 256
      %295 = vsyncadd [#allocation4], %s294
      %s296 = sshll.u32 [#allocation10], 4
      %s297 = int_to_ptr.vmem [resolvable:$true] %s296
      %302 = dma.vmem_to_hbm [thread:$0]  %s297, 256, %s7, [#allocation4], 128, 128, 8
    $region49: #{tpu_custom_call.1} parent=1 // pred_fallthru
      _
    // Predicated region
    $region50: #{tpu_custom_call.1} parent=1 // pred_check
      _
    $region51: #{tpu_custom_call.1} parent=1 // pred_check_branch
      %304 = sbr.rel (0) target = $region53
    $region52: #{tpu_custom_call.1} parent=1 // pred_region
      %305 = dma.done [#allocation4], 256
    $region53: #{tpu_custom_call.1} parent=1 // pred_fallthru
      _
    %306 = vsyncpa [#allocation3], 1
    %307 = vsyncpa [#allocation6], 1
    %308 = vsyncpa [#allocation9], 1
    %309 = vsyncpa [#allocation4], 1

// kernel: tpu_custom_call.1
$region0: #{tpu_custom_call.1}
  #allocation0 [shape = 'u32[]', space=smem, size = 0x4, offset = 0x4, fixed_abs, tag = 'smem constant byte address 0x4 - core index']
  #allocation1 [shape = 'u32[144,128]{1,0:T(1,128)}', space=vmem, size = 0x12000, scoped, tag = 'internal scratch']
  %s0 = inlined_call_operand.hbm [shape: f32[16,16], index: 0, kind: input, shape index: {}]
  %s1 = inlined_call_operand.hbm [shape: bf16[16,32], index: 1, kind: input, shape index: {}]
  %s2 = inlined_call_operand.vmem [shape: f32[1,32], index: 2, kind: input, shape index: {}]
  %s3 = inlined_call_operand.hbm [shape: bf16[32,32], index: 3, kind: input, shape index: {}]
  %s4 = inlined_call_operand.vmem [shape: f32[1,32], index: 4, kind: input, shape index: {}]
  %s5 = inlined_call_operand.hbm [shape: bf16[32,32], index: 5, kind: input, shape index: {}]
  %s6 = inlined_call_operand.vmem [shape: f32[1,32], index: 6, kind: input, shape index: {}]
  %s7 = inlined_call_operand.hbm [shape: f32[16,32], index: 7, kind: output, shape index: {}]
  %s8 = sld [smem:[#allocation0]]
  $region54: #{tpu_custom_call.1} parent=0
    _
  %s10 = ssub.s32 1, %s8
  %s11 = scalar_select 0, %s10, %s8
  $region1: #{tpu_custom_call.1} parent=0
    #allocation2 [shape = 'u8[8192]{0}', space=vmem, size = 0x2000, scoped, tag = 'input window, operand 0, single buffered']
    #allocation3 [shape = 's32[1]{0}', space=sflag, size = 0x4, scoped, tag = 'scoped memory for tpu_custom_call.1']
    #allocation4 [shape = 's32[1]{0}', space=sflag, size = 0x4, scoped, tag = 'scoped memory for tpu_custom_call.1']
    #allocation5 [shape = 'u8[4096]{0}', space=vmem, size = 0x1000, scoped, tag = 'input window, operand 1, single buffered']
    #allocation6 [shape = 's32[1]{0}', space=sflag, size = 0x4, scoped, tag = 'scoped memory for tpu_custom_call.1']
    #allocation7 [shape = 'u8[8192]{0}', space=vmem, size = 0x2000, scoped, tag = 'input window, operand 3, single buffered']
    #allocation8 [shape = 'u8[8192]{0}', space=vmem, size = 0x2000, scoped, tag = 'input window, operand 5, single buffered']
    #allocation9 [shape = 's32[1]{0}', space=sflag, size = 0x4, scoped, tag = 'scoped memory for tpu_custom_call.1']
    #allocation10 [shape = 'u8[8192]{0}', space=vmem, size = 0x2000, scoped, tag = 'output window, operand 0, single buffered']
    %12 = vsyncpa [#allocation3], 0
    %13 = vsyncpa [#allocation6], 0
    %14 = vsyncpa [#allocation9], 0
    %15 = vsyncpa [#allocation4], 0
    // Predicated region
    $region2: #{tpu_custom_call.1} parent=1 // pred_check
      _
    $region3: #{tpu_custom_call.1} parent=1 // pred_check_branch
      %17 = sbr.rel (0) target = $region5
    $region4: #{tpu_custom_call.1} parent=1 // pred_region
      %s19 = ssub.s32 256, 256
      %20 = vsyncadd [#allocation3], %s19
      %s21 = sshll.u32 [#allocation2], 4
      %s22 = int_to_ptr.vmem [resolvable:$true] %s21
      %27 = dma.hbm_to_vmem [thread:$0]  %s0, 256, %s22, [#allocation3], 128, 128, 8
    $region5: #{tpu_custom_call.1} parent=1 // pred_fallthru
      _
    // Predicated region
    $region6: #{tpu_custom_call.1} parent=1 // pred_check
      _
    $region7: #{tpu_custom_call.1} parent=1 // pred_check_branch
      %29 = sbr.rel (0) target = $region9
    $region8: #{tpu_custom_call.1} parent=1 // pred_region
      %s31 = ssub.s32 128, 128
      %32 = vsyncadd [#allocation6], %s31
      %s33 = sshll.u32 [#allocation5], 4
      %s34 = int_to_ptr.vmem [resolvable:$true] %s33
      %39 = dma.hbm_to_vmem [thread:$0]  %s1, 128, %s34, [#allocation6], 64, 64, 4
    $region9: #{tpu_custom_call.1} parent=1 // pred_fallthru
      _
    // Predicated region
    $region10: #{tpu_custom_call.1} parent=1 // pred_check
      _
    $region11: #{tpu_custom_call.1} parent=1 // pred_check_branch
      %41 = sbr.rel (0) target = $region13
    $region12: #{tpu_custom_call.1} parent=1 // pred_region
      _
    $region13: #{tpu_custom_call.1} parent=1 // pred_fallthru
      _
    // Predicated region
    $region14: #{tpu_custom_call.1} parent=1 // pred_check
      _
    $region15: #{tpu_custom_call.1} parent=1 // pred_check_branch
      %43 = sbr.rel (0) target = $region17
    $region16: #{tpu_custom_call.1} parent=1 // pred_region
      %s45 = ssub.s32 256, 256
      %46 = vsyncadd [#allocation6], %s45
      %s47 = sshll.u32 [#allocation7], 4
      %s48 = int_to_ptr.vmem [resolvable:$true] %s47
      %53 = dma.hbm_to_vmem [thread:$0]  %s3, 256, %s48, [#allocation6], 64, 64, 4
    $region17: #{tpu_custom_call.1} parent=1 // pred_fallthru
      _
    // Predicated region
    $region18: #{tpu_custom_call.1} parent=1 // pred_check
      _
    $region19: #{tpu_custom_call.1} parent=1 // pred_check_branch
      %55 = sbr.rel (0) target = $region21
    $region20: #{tpu_custom_call.1} parent=1 // pred_region
      _
    $region21: #{tpu_custom_call.1} parent=1 // pred_fallthru
      _
    // Predicated region
    $region22: #{tpu_custom_call.1} parent=1 // pred_check
      _
    $region23: #{tpu_custom_call.1} parent=1 // pred_check_branch
      %57 = sbr.rel (0) target = $region25
    $region24: #{tpu_custom_call.1} parent=1 // pred_region
      %s59 = ssub.s32 256, 256
      %60 = vsyncadd [#allocation9], %s59
      %s61 = sshll.u32 [#allocation8], 4
      %s62 = int_to_ptr.vmem [resolvable:$true] %s61
      %67 = dma.hbm_to_vmem [thread:$0]  %s5, 256, %s62, [#allocation9], 64, 64, 4
    $region25: #{tpu_custom_call.1} parent=1 // pred_fallthru
      _
    // Predicated region
    $region26: #{tpu_custom_call.1} parent=1 // pred_check
      _
    $region27: #{tpu_custom_call.1} parent=1 // pred_check_branch
      %69 = sbr.rel (0) target = $region29
    $region28: #{tpu_custom_call.1} parent=1 // pred_region
      _
    $region29: #{tpu_custom_call.1} parent=1 // pred_fallthru
      _
    // Predicated region
    $region30: #{tpu_custom_call.1} parent=1 // pred_check
      _
    $region31: #{tpu_custom_call.1} parent=1 // pred_check_branch
      %71 = sbr.rel (0) target = $region33
    $region32: #{tpu_custom_call.1} parent=1 // pred_region
      %72 = dma.done [#allocation3], 256
    $region33: #{tpu_custom_call.1} parent=1 // pred_fallthru
      _
    // Predicated region
    $region34: #{tpu_custom_call.1} parent=1 // pred_check
      _
    $region35: #{tpu_custom_call.1} parent=1 // pred_check_branch
      %74 = sbr.rel (0) target = $region37
    $region36: #{tpu_custom_call.1} parent=1 // pred_region
      %75 = dma.done [#allocation6], 128
    $region37: #{tpu_custom_call.1} parent=1 // pred_fallthru
      _
    // Predicated region
    $region38: #{tpu_custom_call.1} parent=1 // pred_check
      _
    $region39: #{tpu_custom_call.1} parent=1 // pred_check_branch
      %77 = sbr.rel (0) target = $region41
    $region40: #{tpu_custom_call.1} parent=1 // pred_region
      %78 = dma.done [#allocation6], 256
    $region41: #{tpu_custom_call.1} parent=1 // pred_fallthru
      _
    // Predicated region
    $region42: #{tpu_custom_call.1} parent=1 // pred_check
      _
    $region43: #{tpu_custom_call.1} parent=1 // pred_check_branch
      %80 = sbr.rel (0) target = $region45
    $region44: #{tpu_custom_call.1} parent=1 // pred_region
      %81 = dma.done [#allocation9], 256
    $region45: #{tpu_custom_call.1} parent=1 // pred_fallthru
      _
    %v83 = vld [vmem:[#allocation2] sm:$0xff]
    %v84 = vld [vmem:[#allocation2 + $0x8] sm:$0xff]
    %v85 = vpack.c.bf16 %v84, %v83
    %v86 = vld [vmem:[#allocation5] sm:$0xf]
    %v87 = vld [vmem:[#allocation5 + $0x4] sm:$0xf]
    %v88 = vld [vmem:[%s2] sm:$0x1]
    %v90 = vlaneseq
    %v91 = vshrl.u32 %v90, 7
    %v92 = vsub.s32 0, %v91
    %v93 = vrot.slane %v88, %v92
    %v97 = vunpack.c.l.b16 %v86
    %v98 = vunpack.c.l.b16 %v87
    %v99 = vpack.c.b16 %v98, %v97
    %vm101 = vcmask 130048
    %v103 = vsel %vm101, %v85, 0
    %105 = vmatprep.subr.bf16.mxu0 0
    %106 = vmatpush1.bf16.msra.mxu0 0
    %107 = vmatprep.subr.bf16.mxu0 0
    %108 = vmatpush1.bf16.msra.mxu0 0
    %109 = vmatprep.subr.bf16.mxu0 0
    %110 = vmatpush1.bf16.msra.mxu0 0
    %111 = vmatprep.subr.bf16.mxu0 0
    %112 = vmatpush1.bf16.msra.mxu0 0
    %113 = vmatprep.subr.bf16.mxu0 0
    %114 = vmatpush1.bf16.msra.mxu0 0
    %115 = vmatprep.subr.bf16.mxu0 0
    %116 = vmatpush1.bf16.msra.mxu0 0
    %117 = vmatprep.subr.bf16.mxu0 0
    %118 = vmatpush1.bf16.msra.mxu0 0
    %119 = vmatprep.subr.bf16.mxu0 0
    %120 = vmatpush1.bf16.msra.mxu0 %v99
    %121 = vmatprep.subr.bf16.mxu0 0
    %122 = vmatpush2.bf16.msra.mxu0 0
    %123 = vmatprep.subr.bf16.mxu0 0
    %124 = vmatpush2.bf16.msra.mxu0 0
    %125 = vmatprep.subr.bf16.mxu0 0
    %126 = vmatpush2.bf16.msra.mxu0 0
    %127 = vmatprep.subr.bf16.mxu0 0
    %128 = vmatpush2.bf16.msra.mxu0 0
    %129 = vmatprep.subr.bf16.mxu0 0
    %130 = vmatpush2.bf16.msra.mxu0 0
    %131 = vmatprep.subr.bf16.mxu0 0
    %132 = vmatpush2.bf16.msra.mxu0 0
    %133 = vmatprep.subr.bf16.mxu0 0
    %134 = vmatpush2.bf16.msra.mxu0 0
    %135 = vmatprep.subr.bf16.mxu0 0
    %136 = vmatpush2.bf16.msra.mxu0 0
    %137 = vmatprep.mubr.bf16.mxu0 0
    %138 = vmatmul.mubr.bf16.gmra.mxu0 %v103
    %v139 = vpop.f32.mrf.mxu0
    %v140 = vadd.f32 %v93, %v139
    %v141 = vpop.f32.mrf.mxu0
    %v142 = vpop.f32.mrf.mxu0
    %v143 = vadd.f32 %v93, %v142
    %v144 = vpop.f32.mrf.mxu0
    %145 = vdwg.mxu0
    %v146 = vmax.f32 %v140, 0.0
    %v147 = vmax.f32 %v143, 0.0
    %v148 = vpack.c.bf16 %v147, %v146
    %v149 = vld [vmem:[#allocation7] sm:$0xf]
    %v150 = vld [vmem:[#allocation7 + $0x4] sm:$0xf]
    %v151 = vld [vmem:[#allocation7 + $0x8] sm:$0xf]
    %v152 = vld [vmem:[#allocation7 + $0xc] sm:$0xf]
    %v153 = vld [vmem:[%s4] sm:$0x1]
    %v155 = vlaneseq
    %v156 = vshrl.u32 %v155, 7
    %v157 = vsub.s32 0, %v156
    %v158 = vrot.slane %v153, %v157
    %v164 = vunpack.c.l.b16 %v149
    %v165 = vunpack.c.l.b16 %v150
    %v166 = vunpack.c.l.b16 %v151
    %v167 = vunpack.c.l.b16 %v152
    %v168 = vpack.c.b16 %v165, %v164
    %v169 = vpack.c.b16 %v167, %v166
    %vm172 = vcmask 261120
    %v174 = vsel %vm172, %v148, 0
    %176 = vmatprep.subr.bf16.mxu0 0
    %177 = vmatpush1.bf16.msra.mxu0 0
    %178 = vmatprep.subr.bf16.mxu0 0
    %179 = vmatpush1.bf16.msra.mxu0 0
    %180 = vmatprep.subr.bf16.mxu0 0
    %181 = vmatpush1.bf16.msra.mxu0 0
    %182 = vmatprep.subr.bf16.mxu0 0
    %183 = vmatpush1.bf16.msra.mxu0 0
    %184 = vmatprep.subr.bf16.mxu0 0
    %185 = vmatpush1.bf16.msra.mxu0 0
    %186 = vmatprep.subr.bf16.mxu0 0
    %187 = vmatpush1.bf16.msra.mxu0 0
    %188 = vmatprep.subr.bf16.mxu0 0
    %189 = vmatpush1.bf16.msra.mxu0 %v169
    %190 = vmatprep.subr.bf16.mxu0 0
    %191 = vmatpush1.bf16.msra.mxu0 %v168
    %192 = vmatprep.subr.bf16.mxu0 0
    %193 = vmatpush2.bf16.msra.mxu0 0
    %194 = vmatprep.subr.bf16.mxu0 0
    %195 = vmatpush2.bf16.msra.mxu0 0
    %196 = vmatprep.subr.bf16.mxu0 0
    %197 = vmatpush2.bf16.msra.mxu0 0
    %198 = vmatprep.subr.bf16.mxu0 0
    %199 = vmatpush2.bf16.msra.mxu0 0
    %200 = vmatprep.subr.bf16.mxu0 0
    %201 = vmatpush2.bf16.msra.mxu0 0
    %202 = vmatprep.subr.bf16.mxu0 0
    %203 = vmatpush2.bf16.msra.mxu0 0
    %204 = vmatprep.subr.bf16.mxu0 0
    %205 = vmatpush2.bf16.msra.mxu0 0
    %206 = vmatprep.subr.bf16.mxu0 0
    %207 = vmatpush2.bf16.msra.mxu0 0
    %208 = vmatprep.mubr.bf16.mxu0 0
    %209 = vmatmul.mubr.bf16.gmra.mxu0 %v174
    %v210 = vpop.f32.mrf.mxu0
    %v211 = vadd.f32 %v158, %v210
    %v212 = vpop.f32.mrf.mxu0
    %v213 = vpop.f32.mrf.mxu0
    %v214 = vadd.f32 %v158, %v213
    %v215 = vpop.f32.mrf.mxu0
    %216 = vdwg.mxu0
    %v217 = vmax.f32 %v211, 0.0
    %v218 = vmax.f32 %v214, 0.0
    %v219 = vpack.c.bf16 %v218, %v217
    %v220 = vld [vmem:[#allocation8] sm:$0xf]
    %v221 = vld [vmem:[#allocation8 + $0x4] sm:$0xf]
    %v222 = vld [vmem:[#allocation8 + $0x8] sm:$0xf]
    %v223 = vld [vmem:[#allocation8 + $0xc] sm:$0xf]
    %v224 = vld [vmem:[%s6] sm:$0x1]
    %v226 = vlaneseq
    %v227 = vshrl.u32 %v226, 7
    %v228 = vsub.s32 0, %v227
    %v229 = vrot.slane %v224, %v228
    %v235 = vunpack.c.l.b16 %v220
    %v236 = vunpack.c.l.b16 %v221
    %v237 = vunpack.c.l.b16 %v222
    %v238 = vunpack.c.l.b16 %v223
    %v239 = vpack.c.b16 %v236, %v235
    %v240 = vpack.c.b16 %v238, %v237
    %v244 = vsel %vm172, %v219, 0
    %246 = vmatprep.subr.bf16.mxu0 0
    %247 = vmatpush1.bf16.msra.mxu0 0
    %248 = vmatprep.subr.bf16.mxu0 0
    %249 = vmatpush1.bf16.msra.mxu0 0
    %250 = vmatprep.subr.bf16.mxu0 0
    %251 = vmatpush1.bf16.msra.mxu0 0
    %252 = vmatprep.subr.bf16.mxu0 0
    %253 = vmatpush1.bf16.msra.mxu0 0
    %254 = vmatprep.subr.bf16.mxu0 0
    %255 = vmatpush1.bf16.msra.mxu0 0
    %256 = vmatprep.subr.bf16.mxu0 0
    %257 = vmatpush1.bf16.msra.mxu0 0
    %258 = vmatprep.subr.bf16.mxu0 0
    %259 = vmatpush1.bf16.msra.mxu0 %v240
    %260 = vmatprep.subr.bf16.mxu0 0
    %261 = vmatpush1.bf16.msra.mxu0 %v239
    %262 = vmatprep.subr.bf16.mxu0 0
    %263 = vmatpush2.bf16.msra.mxu0 0
    %264 = vmatprep.subr.bf16.mxu0 0
    %265 = vmatpush2.bf16.msra.mxu0 0
    %266 = vmatprep.subr.bf16.mxu0 0
    %267 = vmatpush2.bf16.msra.mxu0 0
    %268 = vmatprep.subr.bf16.mxu0 0
    %269 = vmatpush2.bf16.msra.mxu0 0
    %270 = vmatprep.subr.bf16.mxu0 0
    %271 = vmatpush2.bf16.msra.mxu0 0
    %272 = vmatprep.subr.bf16.mxu0 0
    %273 = vmatpush2.bf16.msra.mxu0 0
    %274 = vmatprep.subr.bf16.mxu0 0
    %275 = vmatpush2.bf16.msra.mxu0 0
    %276 = vmatprep.subr.bf16.mxu0 0
    %277 = vmatpush2.bf16.msra.mxu0 0
    %278 = vmatprep.mubr.bf16.mxu0 0
    %279 = vmatmul.mubr.bf16.gmra.mxu0 %v244
    %v280 = vpop.f32.mrf.mxu0
    %v281 = vadd.f32 %v229, %v280
    %v282 = vpop.f32.mrf.mxu0
    %v283 = vpop.f32.mrf.mxu0
    %v284 = vadd.f32 %v229, %v283
    %v285 = vpop.f32.mrf.mxu0
    %286 = vdwg.mxu0
    %v287 = vmax.f32 %v281, 0.0
    %v288 = vmax.f32 %v284, 0.0
    %289 = vst.msk [vmem:[#allocation10] sm:$0xff] %vm172, %v287
    %290 = vst.msk [vmem:[#allocation10 + $0x8] sm:$0xff] %vm172, %v288
    // Predicated region
    $region46: #{tpu_custom_call.1} parent=1 // pred_check
      _
    $region47: #{tpu_custom_call.1} parent=1 // pred_check_branch
      %292 = sbr.rel (0) target = $region49
    $region48: #{tpu_custom_call.1} parent=1 // pred_region
      %s294 = ssub.s32 256, 256
      %295 = vsyncadd [#allocation4], %s294
      %s296 = sshll.u32 [#allocation10], 4
      %s297 = int_to_ptr.vmem [resolvable:$true] %s296
      %302 = dma.vmem_to_hbm [thread:$0]  %s297, 256, %s7, [#allocation4], 128, 128, 8
    $region49: #{tpu_custom_call.1} parent=1 // pred_fallthru
      _
    // Predicated region
    $region50: #{tpu_custom_call.1} parent=1 // pred_check
      _
    $region51: #{tpu_custom_call.1} parent=1 // pred_check_branch
      %304 = sbr.rel (0) target = $region53
    $region52: #{tpu_custom_call.1} parent=1 // pred_region
      %305 = dma.done [#allocation4], 256
    $region53: #{tpu_custom_call.1} parent=1 // pred_fallthru
      _
    %306 = vsyncpa [#allocation3], 1
    %307 = vsyncpa [#allocation6], 1
    %308 = vsyncpa [#allocation9], 1
    %309 = vsyncpa [#allocation4], 1

</llo_original>
